<compile_context>
chip_gen: v6e
topology: v6e:2x2x1
jax: 0.10.0
libtpu: 0.0.40
codegen_flags: <defaults>
</compile_context>

<pallas_src>
import functools

import jax
import jax.numpy as jnp
from jax.experimental import pallas as pl
from jax.experimental.pallas import tpu as pltpu

LANE = 128  # TPU lane width; pad all feature dims to a multiple of this.


def _round_up(n: int, m: int) -> int:
    return ((n + m - 1) // m) * m


def _mlp_fused_kernel(*refs, n_layers: int):
    """refs = (x_ref, w0_ref, b0_ref, ..., w{L-1}_ref, b{L-1}_ref, o_ref).

    x_ref: (B, D_in_pad) f32
    w_ref: (D_in_pad, D_out_pad) f32 (pre-transposed, zero-padded)
    b_ref: (1, D_out_pad) f32 (zero-padded)
    o_ref: (B, D_out_pad) f32 (lane-dense; caller slices real columns)
    """
    x_ref = refs[0]
    o_ref = refs[-1]
    wb_refs = refs[1:-1]

    h = x_ref[...]  # activations stay in vregs/VMEM for the whole network
    for li in range(n_layers):
        w = wb_refs[2 * li][...]
        b = wb_refs[2 * li + 1][...]
        h = jnp.dot(h, w, preferred_element_type=jnp.float32) + b
        if li != n_layers - 1:          # Perceptron layers: Linear + ReLU
            h = jnp.maximum(h, 0.0)
    o_ref[...] = h.astype(o_ref.dtype)  # final nn.Linear: no activation


def init_mlp_params(key, input_size, hidden_l_size, n_hidden, output_size):
    """Deterministic synthetic init in nn.Linear layout: W (out, in), b (out,)."""
    sizes = [input_size] + [hidden_l_size] * n_hidden + [output_size]
    params = []
    for idx, (d_in, d_out) in enumerate(zip(sizes[:-1], sizes[1:])):
        kw, kb = jax.random.split(jax.random.fold_in(key, idx))
        bound = 1.0 / jnp.sqrt(jnp.float32(d_in))  # nn.Linear default-style scale
        w = jax.random.uniform(kw, (d_out, d_in), jnp.float32, -bound, bound)
        b = jax.random.uniform(kb, (d_out,), jnp.float32, -bound, bound)
        params.append((w, b))
    return params


def prepare_mlp_params(params):
    """One-time (out-of-hot-path) preprocessing of nn.Linear-style params:
    transpose W to (in, out) and zero-pad both feature dims to multiples of
    128; biases become zero-padded (1, out_pad) rows.  Zero padding keeps the
    math exact: padded input columns hit zero weight rows, padded hidden
    columns are relu(0 + 0) = 0 and hit zero weight rows downstream."""
    flat = []
    for (w, b) in params:
        d_out, d_in = w.shape
        d_in_p = _round_up(d_in, LANE)
        d_out_p = _round_up(d_out, LANE)
        w_t = jnp.zeros((d_in_p, d_out_p), w.dtype).at[:d_in, :d_out].set(w.T)
        b_p = jnp.zeros((1, d_out_p), b.dtype).at[0, :d_out].set(b)
        flat.extend([w_t, b_p])
    return flat


def mlp_forward(x_nchw, prepared, output_size):
    """MLP.forward: flatten NCHW, run the fused MLP kernel, slice real outputs."""
    B = x_nchw.shape[0]
    x = x_nchw.reshape(B, -1)            # nn.Flatten(): row-major over (C, H, W)
    d_in = x.shape[1]
    d_in_p = _round_up(d_in, LANE)
    if d_in_p != d_in:
        x = jnp.pad(x, ((0, 0), (0, d_in_p - d_in)))

    n_layers = len(prepared) // 2
    d_out_p = prepared[-1].shape[1]
    n_inputs = 1 + len(prepared)

    y_pad = pl.pallas_call(
        functools.partial(_mlp_fused_kernel, n_layers=n_layers),
        out_shape=jax.ShapeDtypeStruct((B, d_out_p), x.dtype),
        in_specs=[pl.BlockSpec(memory_space=pltpu.MemorySpace.VMEM)] * n_inputs,
        out_specs=pl.BlockSpec(memory_space=pltpu.MemorySpace.VMEM),
    )(x, *prepared)

    return y_pad[:, :output_size]


if __name__ == "__main__":
    # Module config consistent with forward: input_size = C*H*W
    B, C, H, W = 2, 4, 16, 16
    input_size = C * H * W          # 1024
    hidden_l_size = 32
    n_hidden = 2
    output_size = 8

    key = jax.random.PRNGKey(0)
    kx, kp = jax.random.split(key)
    x = jax.random.normal(kx, (B, C, H, W), jnp.float32)
    params = init_mlp_params(kp, input_size, hidden_l_size, n_hidden, output_size)
    prepared = prepare_mlp_params(params)   # transpose + pad ONCE, outside hot path

    y = mlp_forward(x, prepared, output_size)
    jax.block_until_ready(y)

    # sanity check against pure-JAX reference (unpadded nn.Linear semantics)
    ref = x.reshape(B, -1)
    for li, (w, b) in enumerate(params):
        ref = ref @ w.T + b
        if li != len(params) - 1:
            ref = jnp.maximum(ref, 0.0)
    assert y.shape == (B, output_size)
    assert jnp.allclose(y, ref, atol=1e-4, rtol=1e-4)

    print("KERNEL_OK")
</pallas_src>

<mosaic_0001>
module attributes {stable_mosaic.version = 11 : i64} {
  func.func @_mlp_fused_kernel(%arg0: memref<2x1024xf32, #tpu.memory_space<vmem>>, %arg1: memref<1024x128xf32, #tpu.memory_space<vmem>>, %arg2: memref<1x128xf32, #tpu.memory_space<vmem>>, %arg3: memref<128x128xf32, #tpu.memory_space<vmem>>, %arg4: memref<1x128xf32, #tpu.memory_space<vmem>>, %arg5: memref<128x128xf32, #tpu.memory_space<vmem>>, %arg6: memref<1x128xf32, #tpu.memory_space<vmem>>, %arg7: memref<2x128xf32, #tpu.memory_space<vmem>>) attributes {dimension_semantics = [], scalar_prefetch = 0 : i64, scratch_operands = 0 : i64, tpu.core_type = #tpu.core_type<tc>} {
    %c0 = arith.constant 0 : index
    %c0_0 = arith.constant 0 : index
    %0 = vector.load %arg0[%c0, %c0_0] : memref<2x1024xf32, #tpu.memory_space<vmem>>, vector<2x1024xf32>
    %c0_1 = arith.constant 0 : index
    %c0_2 = arith.constant 0 : index
    %1 = vector.load %arg1[%c0_1, %c0_2] : memref<1024x128xf32, #tpu.memory_space<vmem>>, vector<1024x128xf32>
    %c0_3 = arith.constant 0 : index
    %c0_4 = arith.constant 0 : index
    %2 = vector.load %arg2[%c0_3, %c0_4] : memref<1x128xf32, #tpu.memory_space<vmem>>, vector<1x128xf32>
    %cst = arith.constant dense<0.000000e+00> : vector<2x128xf32>
    %3 = tpu.matmul %0, %1, %cst {dimension_numbers = #tpu.dot_dimension_numbers<[1], [0], [0], [1], [0, 0, 1, 1], [], []>} : vector<2x1024xf32>, vector<1024x128xf32>, vector<2x128xf32> -> vector<2x128xf32>
    %4 = vector.broadcast %2 : vector<1x128xf32> to vector<2x128xf32>
    %5 = arith.addf %3, %4 : vector<2x128xf32>
    %cst_5 = arith.constant 0.000000e+00 : f32
    %6 = vector.broadcast %cst_5 : f32 to vector<2x128xf32>
    %7 = arith.maximumf %5, %6 : vector<2x128xf32>
    %c0_6 = arith.constant 0 : index
    %c0_7 = arith.constant 0 : index
    %8 = vector.load %arg3[%c0_6, %c0_7] : memref<128x128xf32, #tpu.memory_space<vmem>>, vector<128x128xf32>
    %c0_8 = arith.constant 0 : index
    %c0_9 = arith.constant 0 : index
    %9 = vector.load %arg4[%c0_8, %c0_9] : memref<1x128xf32, #tpu.memory_space<vmem>>, vector<1x128xf32>
    %cst_10 = arith.constant dense<0.000000e+00> : vector<2x128xf32>
    %10 = tpu.matmul %7, %8, %cst_10 {dimension_numbers = #tpu.dot_dimension_numbers<[1], [0], [0], [1], [0, 0, 1, 1], [], []>} : vector<2x128xf32>, vector<128x128xf32>, vector<2x128xf32> -> vector<2x128xf32>
    %11 = vector.broadcast %9 : vector<1x128xf32> to vector<2x128xf32>
    %12 = arith.addf %10, %11 : vector<2x128xf32>
    %cst_11 = arith.constant 0.000000e+00 : f32
    %13 = vector.broadcast %cst_11 : f32 to vector<2x128xf32>
    %14 = arith.maximumf %12, %13 : vector<2x128xf32>
    %c0_12 = arith.constant 0 : index
    %c0_13 = arith.constant 0 : index
    %15 = vector.load %arg5[%c0_12, %c0_13] : memref<128x128xf32, #tpu.memory_space<vmem>>, vector<128x128xf32>
    %c0_14 = arith.constant 0 : index
    %c0_15 = arith.constant 0 : index
    %16 = vector.load %arg6[%c0_14, %c0_15] : memref<1x128xf32, #tpu.memory_space<vmem>>, vector<1x128xf32>
    %cst_16 = arith.constant dense<0.000000e+00> : vector<2x128xf32>
    %17 = tpu.matmul %14, %15, %cst_16 {dimension_numbers = #tpu.dot_dimension_numbers<[1], [0], [0], [1], [0, 0, 1, 1], [], []>} : vector<2x128xf32>, vector<128x128xf32>, vector<2x128xf32> -> vector<2x128xf32>
    %18 = vector.broadcast %16 : vector<1x128xf32> to vector<2x128xf32>
    %19 = arith.addf %17, %18 : vector<2x128xf32>
    %c0_17 = arith.constant 0 : index
    %c0_18 = arith.constant 0 : index
    %20 = vector.load %arg7[%c0_17, %c0_18] : memref<2x128xf32, #tpu.memory_space<vmem>>, vector<2x128xf32>
    tpu.vector_store %arg7[%c0_17, %c0_18], %19 {strides = array<i32>} : memref<2x128xf32, #tpu.memory_space<vmem>>, vector<2x128xf32>,
    return
  }
}

</mosaic_0001>

<llo_original>
// kernel: tpu_custom_call.1
$region0: #{tpu_custom_call.1}
  #allocation0 [shape = 'u32[]', space=smem, size = 0x4, offset = 0x4, fixed_abs, tag = 'smem constant byte address 0x4 - core index']
  #allocation1 [shape = 'u32[144,128]{1,0:T(1,128)}', space=vmem, size = 0x12000, scoped, tag = 'internal scratch']
  %s0 = inlined_call_operand.hbm [shape: f32[2,1024], index: 0, kind: input, shape index: {}]
  %s1 = inlined_call_operand.hbm [shape: f32[1024,128], index: 1, kind: input, shape index: {}]
  %s2 = inlined_call_operand.vmem [shape: f32[1,128], index: 2, kind: input, shape index: {}]
  %s3 = inlined_call_operand.hbm [shape: f32[128,128], index: 3, kind: input, shape index: {}]
  %s4 = inlined_call_operand.vmem [shape: f32[1,128], index: 4, kind: input, shape index: {}]
  %s5 = inlined_call_operand.hbm [shape: f32[128,128], index: 5, kind: input, shape index: {}]
  %s6 = inlined_call_operand.vmem [shape: f32[1,128], index: 6, kind: input, shape index: {}]
  %s7 = inlined_call_operand.hbm [shape: f32[2,128], index: 7, kind: output, shape index: {}]
  %s8 = sld [smem:[#allocation0]]
  $region54: #{tpu_custom_call.1} parent=0
    _
  %s10 = ssub.s32 1, %s8
  %s11 = scalar_select 0, %s10, %s8
  $region1: #{tpu_custom_call.1} parent=0
    #allocation2 [shape = 'u8[8192]{0}', space=vmem, size = 0x2000, scoped, tag = 'input window, operand 0, single buffered']
    #allocation3 [shape = 's32[1]{0}', space=sflag, size = 0x4, scoped, tag = 'scoped memory for tpu_custom_call.1']
    #allocation4 [shape = 's32[1]{0}', space=sflag, size = 0x4, scoped, tag = 'scoped memory for tpu_custom_call.1']
    #allocation5 [shape = 'u8[524288]{0}', space=vmem, size = 0x80000, scoped, tag = 'input window, operand 1, single buffered']
    #allocation6 [shape = 's32[1]{0}', space=sflag, size = 0x4, scoped, tag = 'scoped memory for tpu_custom_call.1']
    #allocation7 [shape = 'u8[65536]{0}', space=vmem, size = 0x10000, scoped, tag = 'input window, operand 3, single buffered']
    #allocation8 [shape = 'u8[65536]{0}', space=vmem, size = 0x10000, scoped, tag = 'input window, operand 5, single buffered']
    #allocation9 [shape = 's32[1]{0}', space=sflag, size = 0x4, scoped, tag = 'scoped memory for tpu_custom_call.1']
    #allocation10 [shape = 'u8[1024]{0}', space=vmem, size = 0x400, scoped, tag = 'output window, operand 0, single buffered']
    %12 = vsyncpa [#allocation3], 0
    %13 = vsyncpa [#allocation6], 0
    %14 = vsyncpa [#allocation9], 0
    %15 = vsyncpa [#allocation4], 0
    // Predicated region
    $region2: #{tpu_custom_call.1} parent=1 // pred_check
      _
    $region3: #{tpu_custom_call.1} parent=1 // pred_check_branch
      %17 = sbr.rel (0) target = $region5
    $region4: #{tpu_custom_call.1} parent=1 // pred_region
      %s19 = ssub.s32 256, 256
      %20 = vsyncadd [#allocation3], %s19
      %s22 = sshll.u32 [#allocation2], 4
      %s23 = int_to_ptr.vmem [resolvable:$true] %s22
      %25 = dma.hbm_to_vmem [thread:$0]  %s0, 256, %s23, [#allocation3]
    $region5: #{tpu_custom_call.1} parent=1 // pred_fallthru
      _
    // Predicated region
    $region6: #{tpu_custom_call.1} parent=1 // pred_check
      _
    $region7: #{tpu_custom_call.1} parent=1 // pred_check_branch
      %27 = sbr.rel (0) target = $region9
    $region8: #{tpu_custom_call.1} parent=1 // pred_region
      %s29 = ssub.s32 16384, 16384
      %30 = vsyncadd [#allocation6], %s29
      %s31 = sshll.u32 [#allocation5], 4
      %s32 = int_to_ptr.vmem [resolvable:$true] %s31
      %37 = dma.hbm_to_vmem [thread:$0]  %s1, 16384, %s32, [#allocation6], 128, 128, 8
    $region9: #{tpu_custom_call.1} parent=1 // pred_fallthru
      _
    // Predicated region
    $region10: #{tpu_custom_call.1} parent=1 // pred_check
      _
    $region11: #{tpu_custom_call.1} parent=1 // pred_check_branch
      %39 = sbr.rel (0) target = $region13
    $region12: #{tpu_custom_call.1} parent=1 // pred_region
      _
    $region13: #{tpu_custom_call.1} parent=1 // pred_fallthru
      _
    // Predicated region
    $region14: #{tpu_custom_call.1} parent=1 // pred_check
      _
    $region15: #{tpu_custom_call.1} parent=1 // pred_check_branch
      %41 = sbr.rel (0) target = $region17
    $region16: #{tpu_custom_call.1} parent=1 // pred_region
      %s43 = ssub.s32 2048, 2048
      %44 = vsyncadd [#allocation6], %s43
      %s45 = sshll.u32 [#allocation7], 4
      %s46 = int_to_ptr.vmem [resolvable:$true] %s45
      %51 = dma.hbm_to_vmem [thread:$0]  %s3, 2048, %s46, [#allocation6], 128, 128, 8
    $region17: #{tpu_custom_call.1} parent=1 // pred_fallthru
      _
    // Predicated region
    $region18: #{tpu_custom_call.1} parent=1 // pred_check
      _
    $region19: #{tpu_custom_call.1} parent=1 // pred_check_branch
      %53 = sbr.rel (0) target = $region21
    $region20: #{tpu_custom_call.1} parent=1 // pred_region
      _
    $region21: #{tpu_custom_call.1} parent=1 // pred_fallthru
      _
    // Predicated region
    $region22: #{tpu_custom_call.1} parent=1 // pred_check
      _
    $region23: #{tpu_custom_call.1} parent=1 // pred_check_branch
      %55 = sbr.rel (0) target = $region25
    $region24: #{tpu_custom_call.1} parent=1 // pred_region
      %s57 = ssub.s32 2048, 2048
      %58 = vsyncadd [#allocation9], %s57
      %s59 = sshll.u32 [#allocation8], 4
      %s60 = int_to_ptr.vmem [resolvable:$true] %s59
      %65 = dma.hbm_to_vmem [thread:$0]  %s5, 2048, %s60, [#allocation9], 128, 128, 8
    $region25: #{tpu_custom_call.1} parent=1 // pred_fallthru
      _
    // Predicated region
    $region26: #{tpu_custom_call.1} parent=1 // pred_check
      _
    $region27: #{tpu_custom_call.1} parent=1 // pred_check_branch
      %67 = sbr.rel (0) target = $region29
    $region28: #{tpu_custom_call.1} parent=1 // pred_region
      _
    $region29: #{tpu_custom_call.1} parent=1 // pred_fallthru
      _
    // Predicated region
    $region30: #{tpu_custom_call.1} parent=1 // pred_check
      _
    $region31: #{tpu_custom_call.1} parent=1 // pred_check_branch
      %69 = sbr.rel (0) target = $region33
    $region32: #{tpu_custom_call.1} parent=1 // pred_region
      %70 = dma.done [#allocation3], 256
    $region33: #{tpu_custom_call.1} parent=1 // pred_fallthru
      _
    // Predicated region
    $region34: #{tpu_custom_call.1} parent=1 // pred_check
      _
    $region35: #{tpu_custom_call.1} parent=1 // pred_check_branch
      %72 = sbr.rel (0) target = $region37
    $region36: #{tpu_custom_call.1} parent=1 // pred_region
      %73 = dma.done [#allocation6], 16384
    $region37: #{tpu_custom_call.1} parent=1 // pred_fallthru
      _
    // Predicated region
    $region38: #{tpu_custom_call.1} parent=1 // pred_check
      _
    $region39: #{tpu_custom_call.1} parent=1 // pred_check_branch
      %75 = sbr.rel (0) target = $region41
    $region40: #{tpu_custom_call.1} parent=1 // pred_region
      %76 = dma.done [#allocation6], 2048
    $region41: #{tpu_custom_call.1} parent=1 // pred_fallthru
      _
    // Predicated region
    $region42: #{tpu_custom_call.1} parent=1 // pred_check
      _
    $region43: #{tpu_custom_call.1} parent=1 // pred_check_branch
      %78 = sbr.rel (0) target = $region45
    $region44: #{tpu_custom_call.1} parent=1 // pred_region
      %79 = dma.done [#allocation9], 2048
    $region45: #{tpu_custom_call.1} parent=1 // pred_fallthru
      _
    %v80 = vld [vmem:[#allocation2] sm:$0xff]
    %v81 = vld [vmem:[#allocation2 + $0x8] sm:$0xff]
    %v82 = vld [vmem:[#allocation5] sm:$0xff]
    %v83 = vld [vmem:[#allocation5 + $0x8] sm:$0xff]
    %v84 = vld [vmem:[#allocation5 + $0x10] sm:$0xff]
    %v85 = vld [vmem:[#allocation5 + $0x18] sm:$0xff]
    %v86 = vld [vmem:[#allocation5 + $0x20] sm:$0xff]
    %v87 = vld [vmem:[#allocation5 + $0x28] sm:$0xff]
    %v88 = vld [vmem:[#allocation5 + $0x30] sm:$0xff]
    %v89 = vld [vmem:[#allocation5 + $0x38] sm:$0xff]
    %v90 = vld [vmem:[#allocation5 + $0x40] sm:$0xff]
    %v91 = vld [vmem:[#allocation5 + $0x48] sm:$0xff]
    %v92 = vld [vmem:[#allocation5 + $0x50] sm:$0xff]
    %v93 = vld [vmem:[#allocation5 + $0x58] sm:$0xff]
    %v94 = vld [vmem:[#allocation5 + $0x60] sm:$0xff]
    %v95 = vld [vmem:[#allocation5 + $0x68] sm:$0xff]
    %v96 = vld [vmem:[#allocation5 + $0x70] sm:$0xff]
    %v97 = vld [vmem:[#allocation5 + $0x78] sm:$0xff]
    %v98 = vld [vmem:[#allocation5 + $0x80] sm:$0xff]
    %v99 = vld [vmem:[#allocation5 + $0x88] sm:$0xff]
    %v100 = vld [vmem:[#allocation5 + $0x90] sm:$0xff]
    %v101 = vld [vmem:[#allocation5 + $0x98] sm:$0xff]
    %v102 = vld [vmem:[#allocation5 + $0xa0] sm:$0xff]
    %v103 = vld [vmem:[#allocation5 + $0xa8] sm:$0xff]
    %v104 = vld [vmem:[#allocation5 + $0xb0] sm:$0xff]
    %v105 = vld [vmem:[#allocation5 + $0xb8] sm:$0xff]
    %v106 = vld [vmem:[#allocation5 + $0xc0] sm:$0xff]
    %v107 = vld [vmem:[#allocation5 + $0xc8] sm:$0xff]
    %v108 = vld [vmem:[#allocation5 + $0xd0] sm:$0xff]
    %v109 = vld [vmem:[#allocation5 + $0xd8] sm:$0xff]
    %v110 = vld [vmem:[#allocation5 + $0xe0] sm:$0xff]
    %v111 = vld [vmem:[#allocation5 + $0xe8] sm:$0xff]
    %v112 = vld [vmem:[#allocation5 + $0xf0] sm:$0xff]
    %v113 = vld [vmem:[#allocation5 + $0xf8] sm:$0xff]
    %v114 = vld [vmem:[#allocation5 + $0x100] sm:$0xff]
    %v115 = vld [vmem:[#allocation5 + $0x108] sm:$0xff]
    %v116 = vld [vmem:[#allocation5 + $0x110] sm:$0xff]
    %v117 = vld [vmem:[#allocation5 + $0x118] sm:$0xff]
    %v118 = vld [vmem:[#allocation5 + $0x120] sm:$0xff]
    %v119 = vld [vmem:[#allocation5 + $0x128] sm:$0xff]
    %v120 = vld [vmem:[#allocation5 + $0x130] sm:$0xff]
    %v121 = vld [vmem:[#allocation5 + $0x138] sm:$0xff]
    %v122 = vld [vmem:[#allocation5 + $0x140] sm:$0xff]
    %v123 = vld [vmem:[#allocation5 + $0x148] sm:$0xff]
    %v124 = vld [vmem:[#allocation5 + $0x150] sm:$0xff]
    %v125 = vld [vmem:[#allocation5 + $0x158] sm:$0xff]
    %v126 = vld [vmem:[#allocation5 + $0x160] sm:$0xff]
    %v127 = vld [vmem:[#allocation5 + $0x168] sm:$0xff]
    %v128 = vld [vmem:[#allocation5 + $0x170] sm:$0xff]
    %v129 = vld [vmem:[#allocation5 + $0x178] sm:$0xff]
    %v130 = vld [vmem:[#allocation5 + $0x180] sm:$0xff]
    %v131 = vld [vmem:[#allocation5 + $0x188] sm:$0xff]
    %v132 = vld [vmem:[#allocation5 + $0x190] sm:$0xff]
    %v133 = vld [vmem:[#allocation5 + $0x198] sm:$0xff]
    %v134 = vld [vmem:[#allocation5 + $0x1a0] sm:$0xff]
    %v135 = vld [vmem:[#allocation5 + $0x1a8] sm:$0xff]
    %v136 = vld [vmem:[#allocation5 + $0x1b0] sm:$0xff]
    %v137 = vld [vmem:[#allocation5 + $0x1b8] sm:$0xff]
    %v138 = vld [vmem:[#allocation5 + $0x1c0] sm:$0xff]
    %v139 = vld [vmem:[#allocation5 + $0x1c8] sm:$0xff]
    %v140 = vld [vmem:[#allocation5 + $0x1d0] sm:$0xff]
    %v141 = vld [vmem:[#allocation5 + $0x1d8] sm:$0xff]
    %v142 = vld [vmem:[#allocation5 + $0x1e0] sm:$0xff]
    %v143 = vld [vmem:[#allocation5 + $0x1e8] sm:$0xff]
    %v144 = vld [vmem:[#allocation5 + $0x1f0] sm:$0xff]
    %v145 = vld [vmem:[#allocation5 + $0x1f8] sm:$0xff]
    %v146 = vld [vmem:[#allocation5 + $0x200] sm:$0xff]
    %v147 = vld [vmem:[#allocation5 + $0x208] sm:$0xff]
    %v148 = vld [vmem:[#allocation5 + $0x210] sm:$0xff]
    %v149 = vld [vmem:[#allocation5 + $0x218] sm:$0xff]
    %v150 = vld [vmem:[#allocation5 + $0x220] sm:$0xff]
    %v151 = vld [vmem:[#allocation5 + $0x228] sm:$0xff]
    %v152 = vld [vmem:[#allocation5 + $0x230] sm:$0xff]
    %v153 = vld [vmem:[#allocation5 + $0x238] sm:$0xff]
    %v154 = vld [vmem:[#allocation5 + $0x240] sm:$0xff]
    %v155 = vld [vmem:[#allocation5 + $0x248] sm:$0xff]
    %v156 = vld [vmem:[#allocation5 + $0x250] sm:$0xff]
    %v157 = vld [vmem:[#allocation5 + $0x258] sm:$0xff]
    %v158 = vld [vmem:[#allocation5 + $0x260] sm:$0xff]
    %v159 = vld [vmem:[#allocation5 + $0x268] sm:$0xff]
    %v160 = vld [vmem:[#allocation5 + $0x270] sm:$0xff]
    %v161 = vld [vmem:[#allocation5 + $0x278] sm:$0xff]
    %v162 = vld [vmem:[#allocation5 + $0x280] sm:$0xff]
    %v163 = vld [vmem:[#allocation5 + $0x288] sm:$0xff]
    %v164 = vld [vmem:[#allocation5 + $0x290] sm:$0xff]
    %v165 = vld [vmem:[#allocation5 + $0x298] sm:$0xff]
    %v166 = vld [vmem:[#allocation5 + $0x2a0] sm:$0xff]
    %v167 = vld [vmem:[#allocation5 + $0x2a8] sm:$0xff]
    %v168 = vld [vmem:[#allocation5 + $0x2b0] sm:$0xff]
    %v169 = vld [vmem:[#allocation5 + $0x2b8] sm:$0xff]
    %v170 = vld [vmem:[#allocation5 + $0x2c0] sm:$0xff]
    %v171 = vld [vmem:[#allocation5 + $0x2c8] sm:$0xff]
    %v172 = vld [vmem:[#allocation5 + $0x2d0] sm:$0xff]
    %v173 = vld [vmem:[#allocation5 + $0x2d8] sm:$0xff]
    %v174 = vld [vmem:[#allocation5 + $0x2e0] sm:$0xff]
    %v175 = vld [vmem:[#allocation5 + $0x2e8] sm:$0xff]
    %v176 = vld [vmem:[#allocation5 + $0x2f0] sm:$0xff]
    %v177 = vld [vmem:[#allocation5 + $0x2f8] sm:$0xff]
    %v178 = vld [vmem:[#allocation5 + $0x300] sm:$0xff]
    %v179 = vld [vmem:[#allocation5 + $0x308] sm:$0xff]
    %v180 = vld [vmem:[#allocation5 + $0x310] sm:$0xff]
    %v181 = vld [vmem:[#allocation5 + $0x318] sm:$0xff]
    %v182 = vld [vmem:[#allocation5 + $0x320] sm:$0xff]
    %v183 = vld [vmem:[#allocation5 + $0x328] sm:$0xff]
    %v184 = vld [vmem:[#allocation5 + $0x330] sm:$0xff]
    %v185 = vld [vmem:[#allocation5 + $0x338] sm:$0xff]
    %v186 = vld [vmem:[#allocation5 + $0x340] sm:$0xff]
    %v187 = vld [vmem:[#allocation5 + $0x348] sm:$0xff]
    %v188 = vld [vmem:[#allocation5 + $0x350] sm:$0xff]
    %v189 = vld [vmem:[#allocation5 + $0x358] sm:$0xff]
    %v190 = vld [vmem:[#allocation5 + $0x360] sm:$0xff]
    %v191 = vld [vmem:[#allocation5 + $0x368] sm:$0xff]
    %v192 = vld [vmem:[#allocation5 + $0x370] sm:$0xff]
    %v193 = vld [vmem:[#allocation5 + $0x378] sm:$0xff]
    %v194 = vld [vmem:[#allocation5 + $0x380] sm:$0xff]
    %v195 = vld [vmem:[#allocation5 + $0x388] sm:$0xff]
    %v196 = vld [vmem:[#allocation5 + $0x390] sm:$0xff]
    %v197 = vld [vmem:[#allocation5 + $0x398] sm:$0xff]
    %v198 = vld [vmem:[#allocation5 + $0x3a0] sm:$0xff]
    %v199 = vld [vmem:[#allocation5 + $0x3a8] sm:$0xff]
    %v200 = vld [vmem:[#allocation5 + $0x3b0] sm:$0xff]
    %v201 = vld [vmem:[#allocation5 + $0x3b8] sm:$0xff]
    %v202 = vld [vmem:[#allocation5 + $0x3c0] sm:$0xff]
    %v203 = vld [vmem:[#allocation5 + $0x3c8] sm:$0xff]
    %v204 = vld [vmem:[#allocation5 + $0x3d0] sm:$0xff]
    %v205 = vld [vmem:[#allocation5 + $0x3d8] sm:$0xff]
    %v206 = vld [vmem:[#allocation5 + $0x3e0] sm:$0xff]
    %v207 = vld [vmem:[#allocation5 + $0x3e8] sm:$0xff]
    %v208 = vld [vmem:[#allocation5 + $0x3f0] sm:$0xff]
    %v209 = vld [vmem:[#allocation5 + $0x3f8] sm:$0xff]
    %v210 = vld [vmem:[%s2] sm:$0x1]
    %v212 = vlaneseq
    %v213 = vshrl.u32 %v212, 7
    %v214 = vsub.s32 0, %v213
    %v215 = vrot.slane %v210, %v214
    %v219 = vcombine.high %v80, %v80
    %v221 = vunpack.c.l.s4 1983009808
    %v222 = vunpack.c.0.s8 %v221
    %v223 = vlaneseq
    %v224 = vshrl.u32 %v223, 7
    %v225 = vsub.s32 %v222, %v224
    %v226 = vrot.slane %v80, %v225
    %v228 = vunpack.c.l.s4 1983009808
    %v229 = vunpack.c.0.s8 %v228
    %v230 = vlaneseq
    %v231 = vshrl.u32 %v230, 7
    %v232 = vsub.s32 %v229, %v231
    %v233 = vrot.slane %v219, %v232
    %v234 = vcombine.high %v226, %v226
    %v235 = vcombine.high %v233, %v233
    %v236 = vcombine.high %v81, %v81
    %v238 = vunpack.c.l.s4 1983009808
    %v239 = vunpack.c.0.s8 %v238
    %v240 = vlaneseq
    %v241 = vshrl.u32 %v240, 7
    %v242 = vsub.s32 %v239, %v241
    %v243 = vrot.slane %v81, %v242
    %v245 = vunpack.c.l.s4 1983009808
    %v246 = vunpack.c.0.s8 %v245
    %v247 = vlaneseq
    %v248 = vshrl.u32 %v247, 7
    %v249 = vsub.s32 %v246, %v248
    %v250 = vrot.slane %v236, %v249
    %v251 = vcombine.high %v243, %v243
    %v252 = vcombine.high %v250, %v250
    %261 = vmatprep.subr.mxu0 0.0
    %262 = vmatpush1.msra.mxu0 %v97
    %263 = vmatprep.subr.mxu0 0.0
    %264 = vmatpush1.msra.mxu0 %v96
    %265 = vmatprep.subr.mxu0 0.0
    %266 = vmatpush1.msra.mxu0 %v95
    %267 = vmatprep.subr.mxu0 0.0
    %268 = vmatpush1.msra.mxu0 %v94
    %269 = vmatprep.subr.mxu0 0.0
    %270 = vmatpush1.msra.mxu0 %v93
    %271 = vmatprep.subr.mxu0 0.0
    %272 = vmatpush1.msra.mxu0 %v92
    %273 = vmatprep.subr.mxu0 0.0
    %274 = vmatpush1.msra.mxu0 %v91
    %275 = vmatprep.subr.mxu0 0.0
    %276 = vmatpush1.msra.mxu0 %v90
    %277 = vmatprep.subr.mxu0 0.0
    %278 = vmatpush1.msra.mxu0 %v89
    %279 = vmatprep.subr.mxu0 0.0
    %280 = vmatpush1.msra.mxu0 %v88
    %281 = vmatprep.subr.mxu0 0.0
    %282 = vmatpush1.msra.mxu0 %v87
    %283 = vmatprep.subr.mxu0 0.0
    %284 = vmatpush1.msra.mxu0 %v86
    %285 = vmatprep.subr.mxu0 0.0
    %286 = vmatpush1.msra.mxu0 %v85
    %287 = vmatprep.subr.mxu0 0.0
    %288 = vmatpush1.msra.mxu0 %v84
    %289 = vmatprep.subr.mxu0 0.0
    %290 = vmatpush1.msra.mxu0 %v83
    %291 = vmatprep.subr.mxu0 0.0
    %292 = vmatpush1.msra.mxu0 %v82
    %293 = vmatprep.subr.mxu0 0.0
    %294 = vmatpush2.msra.mxu0 %v113
    %295 = vmatprep.subr.mxu0 0.0
    %296 = vmatpush2.msra.mxu0 %v112
    %297 = vmatprep.subr.mxu0 0.0
    %298 = vmatpush2.msra.mxu0 %v111
    %299 = vmatprep.subr.mxu0 0.0
    %300 = vmatpush2.msra.mxu0 %v110
    %301 = vmatprep.subr.mxu0 0.0
    %302 = vmatpush2.msra.mxu0 %v109
    %303 = vmatprep.subr.mxu0 0.0
    %304 = vmatpush2.msra.mxu0 %v108
    %305 = vmatprep.subr.mxu0 0.0
    %306 = vmatpush2.msra.mxu0 %v107
    %307 = vmatprep.subr.mxu0 0.0
    %308 = vmatpush2.msra.mxu0 %v106
    %309 = vmatprep.subr.mxu0 0.0
    %310 = vmatpush2.msra.mxu0 %v105
    %311 = vmatprep.subr.mxu0 0.0
    %312 = vmatpush2.msra.mxu0 %v104
    %313 = vmatprep.subr.mxu0 0.0
    %314 = vmatpush2.msra.mxu0 %v103
    %315 = vmatprep.subr.mxu0 0.0
    %316 = vmatpush2.msra.mxu0 %v102
    %317 = vmatprep.subr.mxu0 0.0
    %318 = vmatpush2.msra.mxu0 %v101
    %319 = vmatprep.subr.mxu0 0.0
    %320 = vmatpush2.msra.mxu0 %v100
    %321 = vmatprep.subr.mxu0 0.0
    %322 = vmatpush2.msra.mxu0 %v99
    %323 = vmatprep.subr.mxu0 0.0
    %324 = vmatpush2.msra.mxu0 %v98
    %325 = vmatprep.mubr.f32.mxu0 %v234
    %326 = vmatmul.mubr.f32.gmra.mxu0 %v226
    %v327 = vpop.f32.mrf.mxu0
    %v328 = vadd.f32 %v215, %v327
    %v329 = vpop.f32.mrf.mxu0
    %330 = vdwg.mxu0
    %331 = vmatprep.subr.mxu0 0.0
    %332 = vmatpush1.msra.mxu0 %v129
    %333 = vmatprep.subr.mxu0 0.0
    %334 = vmatpush1.msra.mxu0 %v128
    %335 = vmatprep.subr.mxu0 0.0
    %336 = vmatpush1.msra.mxu0 %v127
    %337 = vmatprep.subr.mxu0 0.0
    %338 = vmatpush1.msra.mxu0 %v126
    %339 = vmatprep.subr.mxu0 0.0
    %340 = vmatpush1.msra.mxu0 %v125
    %341 = vmatprep.subr.mxu0 0.0
    %342 = vmatpush1.msra.mxu0 %v124
    %343 = vmatprep.subr.mxu0 0.0
    %344 = vmatpush1.msra.mxu0 %v123
    %345 = vmatprep.subr.mxu0 0.0
    %346 = vmatpush1.msra.mxu0 %v122
    %347 = vmatprep.subr.mxu0 0.0
    %348 = vmatpush1.msra.mxu0 %v121
    %349 = vmatprep.subr.mxu0 0.0
    %350 = vmatpush1.msra.mxu0 %v120
    %351 = vmatprep.subr.mxu0 0.0
    %352 = vmatpush1.msra.mxu0 %v119
    %353 = vmatprep.subr.mxu0 0.0
    %354 = vmatpush1.msra.mxu0 %v118
    %355 = vmatprep.subr.mxu0 0.0
    %356 = vmatpush1.msra.mxu0 %v117
    %357 = vmatprep.subr.mxu0 0.0
    %358 = vmatpush1.msra.mxu0 %v116
    %359 = vmatprep.subr.mxu0 0.0
    %360 = vmatpush1.msra.mxu0 %v115
    %361 = vmatprep.subr.mxu0 0.0
    %362 = vmatpush1.msra.mxu0 %v114
    %363 = vmatprep.subr.mxu0 0.0
    %364 = vmatpush2.msra.mxu0 %v145
    %365 = vmatprep.subr.mxu0 0.0
    %366 = vmatpush2.msra.mxu0 %v144
    %367 = vmatprep.subr.mxu0 0.0
    %368 = vmatpush2.msra.mxu0 %v143
    %369 = vmatprep.subr.mxu0 0.0
    %370 = vmatpush2.msra.mxu0 %v142
    %371 = vmatprep.subr.mxu0 0.0
    %372 = vmatpush2.msra.mxu0 %v141
    %373 = vmatprep.subr.mxu0 0.0
    %374 = vmatpush2.msra.mxu0 %v140
    %375 = vmatprep.subr.mxu0 0.0
    %376 = vmatpush2.msra.mxu0 %v139
    %377 = vmatprep.subr.mxu0 0.0
    %378 = vmatpush2.msra.mxu0 %v138
    %379 = vmatprep.subr.mxu0 0.0
    %380 = vmatpush2.msra.mxu0 %v137
    %381 = vmatprep.subr.mxu0 0.0
    %382 = vmatpush2.msra.mxu0 %v136
    %383 = vmatprep.subr.mxu0 0.0
    %384 = vmatpush2.msra.mxu0 %v135
    %385 = vmatprep.subr.mxu0 0.0
    %386 = vmatpush2.msra.mxu0 %v134
    %387 = vmatprep.subr.mxu0 0.0
    %388 = vmatpush2.msra.mxu0 %v133
    %389 = vmatprep.subr.mxu0 0.0
    %390 = vmatpush2.msra.mxu0 %v132
    %391 = vmatprep.subr.mxu0 0.0
    %392 = vmatpush2.msra.mxu0 %v131
    %393 = vmatprep.subr.mxu0 0.0
    %394 = vmatpush2.msra.mxu0 %v130
    %395 = vmatprep.mubr.f32.mxu0 %v235
    %396 = vmatmul.mubr.f32.gmra.mxu0 %v233
    %v397 = vpop.f32.mrf.mxu0
    %v398 = vadd.f32 %v328, %v397
    %v399 = vpop.f32.mrf.mxu0
    %400 = vdwg.mxu0
    %401 = vmatprep.subr.mxu0 0.0
    %402 = vmatpush1.msra.mxu0 %v161
    %403 = vmatprep.subr.mxu0 0.0
    %404 = vmatpush1.msra.mxu0 %v160
    %405 = vmatprep.subr.mxu0 0.0
    %406 = vmatpush1.msra.mxu0 %v159
    %407 = vmatprep.subr.mxu0 0.0
    %408 = vmatpush1.msra.mxu0 %v158
    %409 = vmatprep.subr.mxu0 0.0
    %410 = vmatpush1.msra.mxu0 %v157
    %411 = vmatprep.subr.mxu0 0.0
    %412 = vmatpush1.msra.mxu0 %v156
    %413 = vmatprep.subr.mxu0 0.0
    %414 = vmatpush1.msra.mxu0 %v155
    %415 = vmatprep.subr.mxu0 0.0
    %416 = vmatpush1.msra.mxu0 %v154
    %417 = vmatprep.subr.mxu0 0.0
    %418 = vmatpush1.msra.mxu0 %v153
    %419 = vmatprep.subr.mxu0 0.0
    %420 = vmatpush1.msra.mxu0 %v152
    %421 = vmatprep.subr.mxu0 0.0
    %422 = vmatpush1.msra.mxu0 %v151
    %423 = vmatprep.subr.mxu0 0.0
    %424 = vmatpush1.msra.mxu0 %v150
    %425 = vmatprep.subr.mxu0 0.0
    %426 = vmatpush1.msra.mxu0 %v149
    %427 = vmatprep.subr.mxu0 0.0
    %428 = vmatpush1.msra.mxu0 %v148
    %429 = vmatprep.subr.mxu0 0.0
    %430 = vmatpush1.msra.mxu0 %v147
    %431 = vmatprep.subr.mxu0 0.0
    %432 = vmatpush1.msra.mxu0 %v146
    %433 = vmatprep.subr.mxu0 0.0
    %434 = vmatpush2.msra.mxu0 %v177
    %435 = vmatprep.subr.mxu0 0.0
    %436 = vmatpush2.msra.mxu0 %v176
    %437 = vmatprep.subr.mxu0 0.0
    %438 = vmatpush2.msra.mxu0 %v175
    %439 = vmatprep.subr.mxu0 0.0
    %440 = vmatpush2.msra.mxu0 %v174
    %441 = vmatprep.subr.mxu0 0.0
    %442 = vmatpush2.msra.mxu0 %v173
    %443 = vmatprep.subr.mxu0 0.0
    %444 = vmatpush2.msra.mxu0 %v172
    %445 = vmatprep.subr.mxu0 0.0
    %446 = vmatpush2.msra.mxu0 %v171
    %447 = vmatprep.subr.mxu0 0.0
    %448 = vmatpush2.msra.mxu0 %v170
    %449 = vmatprep.subr.mxu0 0.0
    %450 = vmatpush2.msra.mxu0 %v169
    %451 = vmatprep.subr.mxu0 0.0
    %452 = vmatpush2.msra.mxu0 %v168
    %453 = vmatprep.subr.mxu0 0.0
    %454 = vmatpush2.msra.mxu0 %v167
    %455 = vmatprep.subr.mxu0 0.0
    %456 = vmatpush2.msra.mxu0 %v166
    %457 = vmatprep.subr.mxu0 0.0
    %458 = vmatpush2.msra.mxu0 %v165
    %459 = vmatprep.subr.mxu0 0.0
    %460 = vmatpush2.msra.mxu0 %v164
    %461 = vmatprep.subr.mxu0 0.0
    %462 = vmatpush2.msra.mxu0 %v163
    %463 = vmatprep.subr.mxu0 0.0
    %464 = vmatpush2.msra.mxu0 %v162
    %465 = vmatprep.mubr.f32.mxu0 %v251
    %466 = vmatmul.mubr.f32.gmra.mxu0 %v243
    %v467 = vpop.f32.mrf.mxu0
    %v468 = vadd.f32 %v398, %v467
    %v469 = vpop.f32.mrf.mxu0
    %470 = vdwg.mxu0
    %471 = vmatprep.subr.mxu0 0.0
    %472 = vmatpush1.msra.mxu0 %v193
    %473 = vmatprep.subr.mxu0 0.0
    %474 = vmatpush1.msra.mxu0 %v192
    %475 = vmatprep.subr.mxu0 0.0
    %476 = vmatpush1.msra.mxu0 %v191
    %477 = vmatprep.subr.mxu0 0.0
    %478 = vmatpush1.msra.mxu0 %v190
    %479 = vmatprep.subr.mxu0 0.0
    %480 = vmatpush1.msra.mxu0 %v189
    %481 = vmatprep.subr.mxu0 0.0
    %482 = vmatpush1.msra.mxu0 %v188
    %483 = vmatprep.subr.mxu0 0.0
    %484 = vmatpush1.msra.mxu0 %v187
    %485 = vmatprep.subr.mxu0 0.0
    %486 = vmatpush1.msra.mxu0 %v186
    %487 = vmatprep.subr.mxu0 0.0
    %488 = vmatpush1.msra.mxu0 %v185
    %489 = vmatprep.subr.mxu0 0.0
    %490 = vmatpush1.msra.mxu0 %v184
    %491 = vmatprep.subr.mxu0 0.0
    %492 = vmatpush1.msra.mxu0 %v183
    %493 = vmatprep.subr.mxu0 0.0
    %494 = vmatpush1.msra.mxu0 %v182
    %495 = vmatprep.subr.mxu0 0.0
    %496 = vmatpush1.msra.mxu0 %v181
    %497 = vmatprep.subr.mxu0 0.0
    %498 = vmatpush1.msra.mxu0 %v180
    %499 = vmatprep.subr.mxu0 0.0
    %500 = vmatpush1.msra.mxu0 %v179
    %501 = vmatprep.subr.mxu0 0.0
    %502 = vmatpush1.msra.mxu0 %v178
    %503 = vmatprep.subr.mxu0 0.0
    %504 = vmatpush2.msra.mxu0 %v209
    %505 = vmatprep.subr.mxu0 0.0
    %506 = vmatpush2.msra.mxu0 %v208
    %507 = vmatprep.subr.mxu0 0.0
    %508 = vmatpush2.msra.mxu0 %v207
    %509 = vmatprep.subr.mxu0 0.0
    %510 = vmatpush2.msra.mxu0 %v206
    %511 = vmatprep.subr.mxu0 0.0
    %512 = vmatpush2.msra.mxu0 %v205
    %513 = vmatprep.subr.mxu0 0.0
    %514 = vmatpush2.msra.mxu0 %v204
    %515 = vmatprep.subr.mxu0 0.0
    %516 = vmatpush2.msra.mxu0 %v203
    %517 = vmatprep.subr.mxu0 0.0
    %518 = vmatpush2.msra.mxu0 %v202
    %519 = vmatprep.subr.mxu0 0.0
    %520 = vmatpush2.msra.mxu0 %v201
    %521 = vmatprep.subr.mxu0 0.0
    %522 = vmatpush2.msra.mxu0 %v200
    %523 = vmatprep.subr.mxu0 0.0
    %524 = vmatpush2.msra.mxu0 %v199
    %525 = vmatprep.subr.mxu0 0.0
    %526 = vmatpush2.msra.mxu0 %v198
    %527 = vmatprep.subr.mxu0 0.0
    %528 = vmatpush2.msra.mxu0 %v197
    %529 = vmatprep.subr.mxu0 0.0
    %530 = vmatpush2.msra.mxu0 %v196
    %531 = vmatprep.subr.mxu0 0.0
    %532 = vmatpush2.msra.mxu0 %v195
    %533 = vmatprep.subr.mxu0 0.0
    %534 = vmatpush2.msra.mxu0 %v194
    %535 = vmatprep.mubr.f32.mxu0 %v252
    %536 = vmatmul.mubr.f32.gmra.mxu0 %v250
    %v537 = vpop.f32.mrf.mxu0
    %v538 = vadd.f32 %v468, %v537
    %v539 = vpop.f32.mrf.mxu0
    %540 = vdwg.mxu0
    %v541 = vmax.f32 %v538, 0.0
    %v542 = vld [vmem:[#allocation7] sm:$0xff]
    %v543 = vld [vmem:[#allocation7 + $0x8] sm:$0xff]
    %v544 = vld [vmem:[#allocation7 + $0x10] sm:$0xff]
    %v545 = vld [vmem:[#allocation7 + $0x18] sm:$0xff]
    %v546 = vld [vmem:[#allocation7 + $0x20] sm:$0xff]
    %v547 = vld [vmem:[#allocation7 + $0x28] sm:$0xff]
    %v548 = vld [vmem:[#allocation7 + $0x30] sm:$0xff]
    %v549 = vld [vmem:[#allocation7 + $0x38] sm:$0xff]
    %v550 = vld [vmem:[#allocation7 + $0x40] sm:$0xff]
    %v551 = vld [vmem:[#allocation7 + $0x48] sm:$0xff]
    %v552 = vld [vmem:[#allocation7 + $0x50] sm:$0xff]
    %v553 = vld [vmem:[#allocation7 + $0x58] sm:$0xff]
    %v554 = vld [vmem:[#allocation7 + $0x60] sm:$0xff]
    %v555 = vld [vmem:[#allocation7 + $0x68] sm:$0xff]
    %v556 = vld [vmem:[#allocation7 + $0x70] sm:$0xff]
    %v557 = vld [vmem:[#allocation7 + $0x78] sm:$0xff]
    %v558 = vld [vmem:[%s4] sm:$0x1]
    %v560 = vlaneseq
    %v561 = vshrl.u32 %v560, 7
    %v562 = vsub.s32 0, %v561
    %v563 = vrot.slane %v558, %v562
    %565 = vmatprep.subr.mxu0 0.0
    %566 = vmatpush1.msra.mxu0 %v557
    %567 = vmatprep.subr.mxu0 0.0
    %568 = vmatpush1.msra.mxu0 %v556
    %569 = vmatprep.subr.mxu0 0.0
    %570 = vmatpush1.msra.mxu0 %v555
    %571 = vmatprep.subr.mxu0 0.0
    %572 = vmatpush1.msra.mxu0 %v554
    %573 = vmatprep.subr.mxu0 0.0
    %574 = vmatpush1.msra.mxu0 %v553
    %575 = vmatprep.subr.mxu0 0.0
    %576 = vmatpush1.msra.mxu0 %v552
    %577 = vmatprep.subr.mxu0 0.0
    %578 = vmatpush1.msra.mxu0 %v551
    %579 = vmatprep.subr.mxu0 0.0
    %580 = vmatpush1.msra.mxu0 %v550
    %581 = vmatprep.subr.mxu0 0.0
    %582 = vmatpush1.msra.mxu0 %v549
    %583 = vmatprep.subr.mxu0 0.0
    %584 = vmatpush1.msra.mxu0 %v548
    %585 = vmatprep.subr.mxu0 0.0
    %586 = vmatpush1.msra.mxu0 %v547
    %587 = vmatprep.subr.mxu0 0.0
    %588 = vmatpush1.msra.mxu0 %v546
    %589 = vmatprep.subr.mxu0 0.0
    %590 = vmatpush1.msra.mxu0 %v545
    %591 = vmatprep.subr.mxu0 0.0
    %592 = vmatpush1.msra.mxu0 %v544
    %593 = vmatprep.subr.mxu0 0.0
    %594 = vmatpush1.msra.mxu0 %v543
    %595 = vmatprep.subr.mxu0 0.0
    %596 = vmatpush1.msra.mxu0 %v542
    %597 = vmatprep.subr.mxu0 0.0
    %598 = vmatpush2.msra.mxu0 0.0
    %599 = vmatprep.subr.mxu0 0.0
    %600 = vmatpush2.msra.mxu0 0.0
    %601 = vmatprep.subr.mxu0 0.0
    %602 = vmatpush2.msra.mxu0 0.0
    %603 = vmatprep.subr.mxu0 0.0
    %604 = vmatpush2.msra.mxu0 0.0
    %605 = vmatprep.subr.mxu0 0.0
    %606 = vmatpush2.msra.mxu0 0.0
    %607 = vmatprep.subr.mxu0 0.0
    %608 = vmatpush2.msra.mxu0 0.0
    %609 = vmatprep.subr.mxu0 0.0
    %610 = vmatpush2.msra.mxu0 0.0
    %611 = vmatprep.subr.mxu0 0.0
    %612 = vmatpush2.msra.mxu0 0.0
    %613 = vmatprep.subr.mxu0 0.0
    %614 = vmatpush2.msra.mxu0 0.0
    %615 = vmatprep.subr.mxu0 0.0
    %616 = vmatpush2.msra.mxu0 0.0
    %617 = vmatprep.subr.mxu0 0.0
    %618 = vmatpush2.msra.mxu0 0.0
    %619 = vmatprep.subr.mxu0 0.0
    %620 = vmatpush2.msra.mxu0 0.0
    %621 = vmatprep.subr.mxu0 0.0
    %622 = vmatpush2.msra.mxu0 0.0
    %623 = vmatprep.subr.mxu0 0.0
    %624 = vmatpush2.msra.mxu0 0.0
    %625 = vmatprep.subr.mxu0 0.0
    %626 = vmatpush2.msra.mxu0 0.0
    %627 = vmatprep.subr.mxu0 0.0
    %628 = vmatpush2.msra.mxu0 0.0
    %629 = vmatprep.mubr.f32.mxu0 0.0
    %630 = vmatmul.mubr.f32.gmra.mxu0 %v541
    %v631 = vpop.f32.mrf.mxu0
    %v632 = vadd.f32 %v563, %v631
    %v633 = vpop.f32.mrf.mxu0
    %634 = vdwg.mxu0
    %v635 = vmax.f32 %v632, 0.0
    %v636 = vld [vmem:[#allocation8] sm:$0xff]
    %v637 = vld [vmem:[#allocation8 + $0x8] sm:$0xff]
    %v638 = vld [vmem:[#allocation8 + $0x10] sm:$0xff]
    %v639 = vld [vmem:[#allocation8 + $0x18] sm:$0xff]
    %v640 = vld [vmem:[#allocation8 + $0x20] sm:$0xff]
    %v641 = vld [vmem:[#allocation8 + $0x28] sm:$0xff]
    %v642 = vld [vmem:[#allocation8 + $0x30] sm:$0xff]
    %v643 = vld [vmem:[#allocation8 + $0x38] sm:$0xff]
    %v644 = vld [vmem:[#allocation8 + $0x40] sm:$0xff]
    %v645 = vld [vmem:[#allocation8 + $0x48] sm:$0xff]
    %v646 = vld [vmem:[#allocation8 + $0x50] sm:$0xff]
    %v647 = vld [vmem:[#allocation8 + $0x58] sm:$0xff]
    %v648 = vld [vmem:[#allocation8 + $0x60] sm:$0xff]
    %v649 = vld [vmem:[#allocation8 + $0x68] sm:$0xff]
    %v650 = vld [vmem:[#allocation8 + $0x70] sm:$0xff]
    %v651 = vld [vmem:[#allocation8 + $0x78] sm:$0xff]
    %v652 = vld [vmem:[%s6] sm:$0x1]
    %v654 = vlaneseq
    %v655 = vshrl.u32 %v654, 7
    %v656 = vsub.s32 0, %v655
    %v657 = vrot.slane %v652, %v656
    %659 = vmatprep.subr.mxu0 0.0
    %660 = vmatpush1.msra.mxu0 %v651
    %661 = vmatprep.subr.mxu0 0.0
    %662 = vmatpush1.msra.mxu0 %v650
    %663 = vmatprep.subr.mxu0 0.0
    %664 = vmatpush1.msra.mxu0 %v649
    %665 = vmatprep.subr.mxu0 0.0
    %666 = vmatpush1.msra.mxu0 %v648
    %667 = vmatprep.subr.mxu0 0.0
    %668 = vmatpush1.msra.mxu0 %v647
    %669 = vmatprep.subr.mxu0 0.0
    %670 = vmatpush1.msra.mxu0 %v646
    %671 = vmatprep.subr.mxu0 0.0
    %672 = vmatpush1.msra.mxu0 %v645
    %673 = vmatprep.subr.mxu0 0.0
    %674 = vmatpush1.msra.mxu0 %v644
    %675 = vmatprep.subr.mxu0 0.0
    %676 = vmatpush1.msra.mxu0 %v643
    %677 = vmatprep.subr.mxu0 0.0
    %678 = vmatpush1.msra.mxu0 %v642
    %679 = vmatprep.subr.mxu0 0.0
    %680 = vmatpush1.msra.mxu0 %v641
    %681 = vmatprep.subr.mxu0 0.0
    %682 = vmatpush1.msra.mxu0 %v640
    %683 = vmatprep.subr.mxu0 0.0
    %684 = vmatpush1.msra.mxu0 %v639
    %685 = vmatprep.subr.mxu0 0.0
    %686 = vmatpush1.msra.mxu0 %v638
    %687 = vmatprep.subr.mxu0 0.0
    %688 = vmatpush1.msra.mxu0 %v637
    %689 = vmatprep.subr.mxu0 0.0
    %690 = vmatpush1.msra.mxu0 %v636
    %691 = vmatprep.subr.mxu0 0.0
    %692 = vmatpush2.msra.mxu0 0.0
    %693 = vmatprep.subr.mxu0 0.0
    %694 = vmatpush2.msra.mxu0 0.0
    %695 = vmatprep.subr.mxu0 0.0
    %696 = vmatpush2.msra.mxu0 0.0
    %697 = vmatprep.subr.mxu0 0.0
    %698 = vmatpush2.msra.mxu0 0.0
    %699 = vmatprep.subr.mxu0 0.0
    %700 = vmatpush2.msra.mxu0 0.0
    %701 = vmatprep.subr.mxu0 0.0
    %702 = vmatpush2.msra.mxu0 0.0
    %703 = vmatprep.subr.mxu0 0.0
    %704 = vmatpush2.msra.mxu0 0.0
    %705 = vmatprep.subr.mxu0 0.0
    %706 = vmatpush2.msra.mxu0 0.0
    %707 = vmatprep.subr.mxu0 0.0
    %708 = vmatpush2.msra.mxu0 0.0
    %709 = vmatprep.subr.mxu0 0.0
    %710 = vmatpush2.msra.mxu0 0.0
    %711 = vmatprep.subr.mxu0 0.0
    %712 = vmatpush2.msra.mxu0 0.0
    %713 = vmatprep.subr.mxu0 0.0
    %714 = vmatpush2.msra.mxu0 0.0
    %715 = vmatprep.subr.mxu0 0.0
    %716 = vmatpush2.msra.mxu0 0.0
    %717 = vmatprep.subr.mxu0 0.0
    %718 = vmatpush2.msra.mxu0 0.0
    %719 = vmatprep.subr.mxu0 0.0
    %720 = vmatpush2.msra.mxu0 0.0
    %721 = vmatprep.subr.mxu0 0.0
    %722 = vmatpush2.msra.mxu0 0.0
    %723 = vmatprep.mubr.f32.mxu0 0.0
    %724 = vmatmul.mubr.f32.gmra.mxu0 %v635
    %v725 = vpop.f32.mrf.mxu0
    %v726 = vadd.f32 %v657, %v725
    %v727 = vpop.f32.mrf.mxu0
    %728 = vdwg.mxu0
    %729 = vst [vmem:[#allocation10] sm:$0x3] %v726
    // Predicated region
    $region46: #{tpu_custom_call.1} parent=1 // pred_check
      _
    $region47: #{tpu_custom_call.1} parent=1 // pred_check_branch
      %731 = sbr.rel (0) target = $region49
    $region48: #{tpu_custom_call.1} parent=1 // pred_region
      %s733 = ssub.s32 32, 32
      %734 = vsyncadd [#allocation4], %s733
      %s736 = sshll.u32 [#allocation10], 4
      %s737 = int_to_ptr.vmem [resolvable:$true] %s736
      %739 = dma.vmem_to_hbm [thread:$0]  %s737, 32, %s7, [#allocation4]
    $region49: #{tpu_custom_call.1} parent=1 // pred_fallthru
      _
    // Predicated region
    $region50: #{tpu_custom_call.1} parent=1 // pred_check
      _
    $region51: #{tpu_custom_call.1} parent=1 // pred_check_branch
      %741 = sbr.rel (0) target = $region53
    $region52: #{tpu_custom_call.1} parent=1 // pred_region
      %742 = dma.done [#allocation4], 32
    $region53: #{tpu_custom_call.1} parent=1 // pred_fallthru
      _
    %743 = vsyncpa [#allocation3], 1
    %744 = vsyncpa [#allocation6], 1
    %745 = vsyncpa [#allocation9], 1
    %746 = vsyncpa [#allocation4], 1

</llo_original>
